<compile_context>
chip_gen: v6e
topology: v6e:2x2x1
jax: 0.10.0
libtpu: 0.0.40
codegen_flags: <defaults>
</compile_context>

<pallas_src>
import math

import jax
import jax.numpy as jnp
from jax import lax
from jax.experimental import pallas as pl
from jax.experimental.pallas import tpu as pltpu

H = 40                    # LSTM hidden size per direction
IN = 666                  # LSTM input feature size
IN_PAD = 672              # padded input width (multiple of 16)
G2 = 2 * H                # 80: one fused fwd+bwd gate group
GW = 6 * H                # 240: [i_f i_b | g_f g_b | o_f o_b]
LANES = 256               # lane-padded gate width per layer
NCODE = 20                # fc output size
OUT_W = 128               # packed output width: code in lanes 0:20, out in lane 20
W2FC_W = LANES + OUT_W    # 384: merged [layer-2 gates | fc] slab width
BM = 8                    # batch rows per grid step (sublane tile)


def _sigmoid(z):
    # single exact EUP op: sigmoid(z) = 0.5 * (tanh(z/2) + 1)
    return 0.5 * jnp.tanh(0.5 * z) + 0.5


def subnet2_kernel(x_ref, val_ref, w1_ref, w2fc_ref, vec_ref, out_ref):
    """BM independent SubNet2 forwards (seq=1, batch=1, h0=c0=0) per grid step."""
    xb = x_ref[...].astype(jnp.bfloat16)                        # (BM, 672)

    def bi_cell(gates):
        # gates: (BM, 256) f32, cols [i_f i_b | g_f g_b | o_f o_b | zero pad]
        i = _sigmoid(gates[:, 0:G2])
        g = jnp.tanh(gates[:, G2:2 * G2])
        o = _sigmoid(gates[:, 2 * G2:3 * G2])
        return o * jnp.tanh(i * g)                              # c0 == 0 -> c = i*g

    # layer 1: both directions in one matmul; recurrent term is exactly 0 (h0 = 0)
    g1 = (jnp.dot(xb, w1_ref[...], preferred_element_type=jnp.float32)
          + vec_ref[0:1, 0:LANES])
    y1 = bi_cell(g1)                                            # (BM, 80) = [fwd|bwd]

    # layer 2: weights live in the merged slab, lanes 0:256
    g2 = (jnp.dot(y1.astype(jnp.bfloat16), w2fc_ref[:, 0:LANES],
                  preferred_element_type=jnp.float32)
          + vec_ref[1:2, 0:LANES])
    y2 = bi_cell(g2)                                            # (BM, 80)

    # fc: Linear(80, 20), weights in merged slab lanes 256:384 (cols 20:128 zero)
    code128 = (jnp.dot(y2.astype(jnp.bfloat16), w2fc_ref[:, LANES:W2FC_W],
                       preferred_element_type=jnp.float32)
               + vec_ref[2:3, 0:OUT_W])                         # (BM, 128)

    lane = lax.broadcasted_iota(jnp.int32, code128.shape, 1)
    valid = lane < NCODE

    # log_softmax over the 20 real code lanes (exact arithmetic)
    m = jnp.max(jnp.where(valid, code128, -jnp.inf), axis=1, keepdims=True)
    z = code128 - m
    e = jnp.where(valid, jnp.exp(z), 0.0)
    sum_e = jnp.sum(e, axis=1, keepdims=True)
    code_ls = z - jnp.log(sum_e)                                # valid on lanes 0:20

    # decode: mix(cat(exp(code), val)) as a VPU lane reduction (no tiny MXU dot)
    exp_code = e / sum_e                                        # = exp(code_ls), 0 elsewhere
    feat = exp_code + jnp.where(lane == NCODE, val_ref[...],
                                jnp.where(lane == NCODE + 1, 1.0, 0.0))
    mixr = vec_ref[3:4, 0:OUT_W]    # lanes 0:20 w_code, 20 w_val, 21 bias, rest 0
    out_val = jnp.sum(feat * mixr, axis=1, keepdims=True)       # (BM, 1)

    # lane-dense packed output: lanes 0:20 = log_softmax(code), lane 20 = out
    out_ref[...] = jnp.where(valid, code_ls,
                             jnp.where(lane == NCODE, out_val, 0.0))


def init_params(key):
    """PyTorch-style U(-1/sqrt(fan), 1/sqrt(fan)) init, packed for the kernel.

    Host-side packing (done once):
      * recurrent weights W_hh dropped                      (h0 = 0 -> contribution 0)
      * forget-gate rows pruned                             (f * c0 == 0)
      * gate columns ordered [i_f i_b | g_f g_b | o_f o_b]  (contiguous 80-lane groups)
      * layer-2 gate weights and fc weights merged into one (80, 384) slab
      * matmul weights cast to bf16 (f32 MXU accumulation); biases / mix kept f32
    """
    def u(k, shape, bound):
        return jax.random.uniform(k, shape, jnp.float32, -bound, bound)

    keys = iter(jax.random.split(key, 20))
    kl = 1.0 / math.sqrt(H)

    def direction(in_dim):
        # PyTorch gate order in weight_ih / biases is [i | f | g | o]
        w_ih = u(next(keys), (4 * H, in_dim), kl)
        b = u(next(keys), (4 * H,), kl) + u(next(keys), (4 * H,), kl)   # b_ih + b_hh
        wi, wg, wo = w_ih[0:H].T, w_ih[2 * H:3 * H].T, w_ih[3 * H:4 * H].T
        bi, bg, bo = b[0:H], b[2 * H:3 * H], b[3 * H:4 * H]
        return (wi, wg, wo), (bi, bg, bo)

    def pack_layer(in_dim, pad_rows):
        (wi_f, wg_f, wo_f), (bi_f, bg_f, bo_f) = direction(in_dim)
        (wi_b, wg_b, wo_b), (bi_b, bg_b, bo_b) = direction(in_dim)
        w = jnp.zeros((pad_rows, LANES), jnp.float32)
        w = (w.at[0:in_dim, 0 * H:1 * H].set(wi_f).at[0:in_dim, 1 * H:2 * H].set(wi_b)
              .at[0:in_dim, 2 * H:3 * H].set(wg_f).at[0:in_dim, 3 * H:4 * H].set(wg_b)
              .at[0:in_dim, 4 * H:5 * H].set(wo_f).at[0:in_dim, 5 * H:6 * H].set(wo_b))
        b = jnp.zeros((LANES,), jnp.float32)
        b = (b.at[0 * H:1 * H].set(bi_f).at[1 * H:2 * H].set(bi_b)
              .at[2 * H:3 * H].set(bg_f).at[3 * H:4 * H].set(bg_b)
              .at[4 * H:5 * H].set(bo_f).at[5 * H:6 * H].set(bo_b))
        return w, b

    w1_f32, b1 = pack_layer(IN, IN_PAD)
    w2_f32, b2 = pack_layer(2 * H, 2 * H)

    kfc = 1.0 / math.sqrt(2.0 * H)
    fcw = u(next(keys), (NCODE, 2 * H), kfc).T                  # (80, 20)
    fcb = u(next(keys), (NCODE,), kfc)
    kmx = 1.0 / math.sqrt(NCODE + 1.0)
    mixw = u(next(keys), (1, NCODE + 1), kmx)                   # (1, 21)
    mixb = u(next(keys), (1,), kmx)

    w1 = w1_f32.astype(jnp.bfloat16)                            # (672, 256) bf16
    w2fc = jnp.zeros((2 * H, W2FC_W), jnp.float32)              # merged slab
    w2fc = w2fc.at[:, 0:LANES].set(w2_f32).at[:, LANES:LANES + NCODE].set(fcw)
    w2fc = w2fc.astype(jnp.bfloat16)                            # (80, 384) bf16

    vec = jnp.zeros((8, W2FC_W), jnp.float32)
    vec = vec.at[0, 0:LANES].set(b1).at[1, 0:LANES].set(b2)
    vec = vec.at[2, 0:NCODE].set(fcb)
    vec = vec.at[3, 0:NCODE + 1].set(mixw[0]).at[3, NCODE + 1].set(mixb[0])
    return w1, w2fc, vec


def subnet2_forward_batched(xs, vals, params):
    """B independent (seq=1, batch=1) SubNet2 forwards in ONE pallas_call.

    xs: (B, 666), vals: (B,) -> code (B, 20) [log_softmax], out (B, 1).
    """
    w1, w2fc, vec = params
    B = xs.shape[0]
    b_pad = ((B + BM - 1) // BM) * BM

    xp = jnp.zeros((b_pad, IN_PAD), jnp.float32).at[:B, 0:IN].set(
        xs.reshape(B, IN).astype(jnp.float32))
    vp = jnp.zeros((b_pad, 1), jnp.float32).at[:B, 0].set(
        vals.reshape(B).astype(jnp.float32))

    flops = b_pad * 2 * (IN_PAD * LANES + 2 * H * LANES + 2 * H * OUT_W)
    transcendentals = b_pad * (2 * 4 * G2 + OUT_W + 1)
    bytes_accessed = (int(w1.size) * 2 + int(w2fc.size) * 2 + int(vec.size) * 4
                      + int(xp.size) * 4 + int(vp.size) * 4 + b_pad * OUT_W * 4)

    packed = pl.pallas_call(
        subnet2_kernel,
        out_shape=jax.ShapeDtypeStruct((b_pad, OUT_W), jnp.float32),
        grid=(b_pad // BM,),
        in_specs=[
            pl.BlockSpec((BM, IN_PAD), lambda i: (i, 0)),        # per-step activations
            pl.BlockSpec((BM, 1), lambda i: (i, 0)),             # per-step val scalars
            pl.BlockSpec((IN_PAD, LANES), lambda i: (0, 0)),     # grid-invariant: DMA once
            pl.BlockSpec((2 * H, W2FC_W), lambda i: (0, 0)),     # grid-invariant: DMA once
            pl.BlockSpec((8, W2FC_W), lambda i: (0, 0)),         # grid-invariant: DMA once
        ],
        out_specs=pl.BlockSpec((BM, OUT_W), lambda i: (i, 0)),
        compiler_params=pltpu.CompilerParams(dimension_semantics=("parallel",)),
        cost_estimate=pl.CostEstimate(flops=flops,
                                      transcendentals=transcendentals,
                                      bytes_accessed=bytes_accessed),
    )(xp, vp, w1, w2fc, vec)

    code = packed[:B, 0:NCODE]           # per sample == PyTorch code.view(1, -1)
    out = packed[:B, NCODE:NCODE + 1]    # per sample == mix output (1, 1)
    return code, out


def subnet2_forward(x, val, params):
    """Single-sample interface matching the PyTorch module: x (1,1,666), val (1,)."""
    code, out = subnet2_forward_batched(x.reshape(1, IN), val.reshape(1), params)
    return code.reshape(1, 1, NCODE), out.reshape(1, 1)


def subnet2_reference(xs, vals, params):
    """Pure-JAX reference using the same bf16-rounded weights/inputs."""
    w1, w2fc, vec = params
    w1f = w1.astype(jnp.float32)
    w2f = w2fc[:, 0:LANES].astype(jnp.float32)
    wfc = w2fc[:, LANES:LANES + NCODE].astype(jnp.float32)
    B = xs.shape[0]
    xp = jnp.zeros((B, IN_PAD), jnp.float32).at[:, 0:IN].set(xs.reshape(B, IN))
    xb = xp.astype(jnp.bfloat16).astype(jnp.float32)

    def cell(g):
        sig = lambda z: 0.5 * jnp.tanh(0.5 * z) + 0.5
        i = sig(g[:, 0:G2])
        gg = jnp.tanh(g[:, G2:2 * G2])
        o = sig(g[:, 2 * G2:3 * G2])
        return o * jnp.tanh(i * gg)

    y1 = cell(xb @ w1f + vec[0:1, 0:LANES])
    y1b = y1.astype(jnp.bfloat16).astype(jnp.float32)
    y2 = cell(y1b @ w2f + vec[1:2, 0:LANES])
    y2b = y2.astype(jnp.bfloat16).astype(jnp.float32)
    logits = y2b @ wfc + vec[2:3, 0:NCODE]
    code = jax.nn.log_softmax(logits, axis=1)
    out = (jnp.exp(code) @ vec[3, 0:NCODE].reshape(NCODE, 1)
           + vals.reshape(B, 1) * vec[3, NCODE] + vec[3, NCODE + 1])
    return code, out


if __name__ == "__main__":
    key = jax.random.PRNGKey(0)
    kx, kv, kp = jax.random.split(key, 3)

    B = 16
    # B independent (seq=1, batch=1, 666) inputs -- one SubNet2 forward per row
    xs = jax.random.normal(kx, (B, 1, 1, IN), jnp.float32)
    vals = jax.random.normal(kv, (B,), jnp.float32)
    params = init_params(kp)

    code, out = subnet2_forward_batched(xs.reshape(B, IN), vals, params)
    jax.block_until_ready((code, out))

    assert code.shape == (B, NCODE) and out.shape == (B, 1)
    # log_softmax sanity: exp(code) sums to 1 per sample
    row_sums = jnp.sum(jnp.exp(code), axis=1)
    assert bool(jnp.all(jnp.abs(row_sums - 1.0) < 1e-4))
    assert bool(jnp.all(jnp.isfinite(code))) and bool(jnp.all(jnp.isfinite(out)))

    # correctness gate vs. pure-JAX reference (same bf16 rounding)
    code_ref, out_ref = subnet2_reference(xs.reshape(B, IN), vals, params)
    assert float(jnp.max(jnp.abs(code - code_ref))) < 5e-3
    assert float(jnp.max(jnp.abs(out - out_ref))) < 5e-3

    # single-sample interface matching the PyTorch module signature
    code1, out1 = subnet2_forward(xs[0], vals[0:1], params)
    jax.block_until_ready((code1, out1))
    assert code1.shape == (1, 1, NCODE) and out1.shape == (1, 1)

    print("KERNEL_OK")
</pallas_src>

<mosaic_0001>
module attributes {stable_mosaic.version = 11 : i64} {
  func.func @subnet2_kernel(%arg0: i32, %arg1: memref<8x672xf32, #tpu.memory_space<vmem>>, %arg2: memref<8x1xf32, #tpu.memory_space<vmem>>, %arg3: memref<672x256xbf16, #tpu.memory_space<vmem>>, %arg4: memref<80x384xbf16, #tpu.memory_space<vmem>>, %arg5: memref<8x384xf32, #tpu.memory_space<vmem>>, %arg6: memref<8x128xf32, #tpu.memory_space<vmem>>) attributes {dimension_semantics = [#tpu.dimension_semantics<parallel>], iteration_bounds = array<i64: 2>, scalar_prefetch = 0 : i64, scratch_operands = 0 : i64, tpu.core_type = #tpu.core_type<tc>, window_params = [{transform_indices = @transform_0, window_bounds = array<i64: 8, 672>}, {transform_indices = @transform_1, window_bounds = array<i64: 8, 1>}, {pipeline_mode = #tpu.pipeline_mode<synchronous>, transform_indices = @transform_2, window_bounds = array<i64: 672, 256>}, {pipeline_mode = #tpu.pipeline_mode<synchronous>, transform_indices = @transform_3, window_bounds = array<i64: 80, 384>}, {pipeline_mode = #tpu.pipeline_mode<synchronous>, transform_indices = @transform_4, window_bounds = array<i64: 8, 384>}, {transform_indices = @transform_5, window_bounds = array<i64: 8, 128>}]} {
    %c0 = arith.constant 0 : index
    %c0_0 = arith.constant 0 : index
    %0 = vector.load %arg1[%c0, %c0_0] : memref<8x672xf32, #tpu.memory_space<vmem>>, vector<8x672xf32>
    %1 = arith.truncf %0 : vector<8x672xf32> to vector<8x672xbf16>
    %c0_1 = arith.constant 0 : index
    %c0_2 = arith.constant 0 : index
    %2 = vector.load %arg3[%c0_1, %c0_2] : memref<672x256xbf16, #tpu.memory_space<vmem>>, vector<672x256xbf16>
    %cst = arith.constant dense<0.000000e+00> : vector<8x256xf32>
    %3 = tpu.matmul %1, %2, %cst {dimension_numbers = #tpu.dot_dimension_numbers<[1], [0], [0], [1], [0, 0, 1, 1], [], []>} : vector<8x672xbf16>, vector<672x256xbf16>, vector<8x256xf32> -> vector<8x256xf32>
    %c0_3 = arith.constant 0 : index
    %c0_4 = arith.constant 0 : index
    %4 = vector.load %arg5[%c0_3, %c0_4] : memref<8x384xf32, #tpu.memory_space<vmem>>, vector<1x256xf32>
    %5 = vector.broadcast %4 : vector<1x256xf32> to vector<8x256xf32>
    %6 = arith.addf %3, %5 : vector<8x256xf32>
    %7 = vector.extract_strided_slice %6 {offsets = [0, 0], sizes = [8, 80], strides = [1, 1]} : vector<8x256xf32> to vector<8x80xf32>
    %cst_5 = arith.constant 5.000000e-01 : f32
    %8 = vector.broadcast %cst_5 : f32 to vector<8x80xf32>
    %9 = arith.mulf %8, %7 : vector<8x80xf32>
    %10 = math.tanh %9 : vector<8x80xf32>
    %cst_6 = arith.constant 5.000000e-01 : f32
    %11 = vector.broadcast %cst_6 : f32 to vector<8x80xf32>
    %12 = arith.mulf %11, %10 : vector<8x80xf32>
    %cst_7 = arith.constant 5.000000e-01 : f32
    %13 = vector.broadcast %cst_7 : f32 to vector<8x80xf32>
    %14 = arith.addf %12, %13 : vector<8x80xf32>
    %15 = vector.extract_strided_slice %6 {offsets = [0, 80], sizes = [8, 80], strides = [1, 1]} : vector<8x256xf32> to vector<8x80xf32>
    %16 = math.tanh %15 : vector<8x80xf32>
    %17 = vector.extract_strided_slice %6 {offsets = [0, 160], sizes = [8, 80], strides = [1, 1]} : vector<8x256xf32> to vector<8x80xf32>
    %cst_8 = arith.constant 5.000000e-01 : f32
    %18 = vector.broadcast %cst_8 : f32 to vector<8x80xf32>
    %19 = arith.mulf %18, %17 : vector<8x80xf32>
    %20 = math.tanh %19 : vector<8x80xf32>
    %cst_9 = arith.constant 5.000000e-01 : f32
    %21 = vector.broadcast %cst_9 : f32 to vector<8x80xf32>
    %22 = arith.mulf %21, %20 : vector<8x80xf32>
    %cst_10 = arith.constant 5.000000e-01 : f32
    %23 = vector.broadcast %cst_10 : f32 to vector<8x80xf32>
    %24 = arith.addf %22, %23 : vector<8x80xf32>
    %25 = arith.mulf %14, %16 : vector<8x80xf32>
    %26 = math.tanh %25 : vector<8x80xf32>
    %27 = arith.mulf %24, %26 : vector<8x80xf32>
    %28 = arith.truncf %27 : vector<8x80xf32> to vector<8x80xbf16>
    %c0_11 = arith.constant 0 : index
    %c0_12 = arith.constant 0 : index
    %29 = vector.load %arg4[%c0_11, %c0_12] : memref<80x384xbf16, #tpu.memory_space<vmem>>, vector<80x256xbf16>
    %cst_13 = arith.constant dense<0.000000e+00> : vector<8x256xf32>
    %30 = tpu.matmul %28, %29, %cst_13 {dimension_numbers = #tpu.dot_dimension_numbers<[1], [0], [0], [1], [0, 0, 1, 1], [], []>} : vector<8x80xbf16>, vector<80x256xbf16>, vector<8x256xf32> -> vector<8x256xf32>
    %c1 = arith.constant 1 : index
    %c0_14 = arith.constant 0 : index
    %31 = vector.load %arg5[%c1, %c0_14] : memref<8x384xf32, #tpu.memory_space<vmem>>, vector<1x256xf32>
    %32 = vector.broadcast %31 : vector<1x256xf32> to vector<8x256xf32>
    %33 = arith.addf %30, %32 : vector<8x256xf32>
    %34 = vector.extract_strided_slice %33 {offsets = [0, 0], sizes = [8, 80], strides = [1, 1]} : vector<8x256xf32> to vector<8x80xf32>
    %cst_15 = arith.constant 5.000000e-01 : f32
    %35 = vector.broadcast %cst_15 : f32 to vector<8x80xf32>
    %36 = arith.mulf %35, %34 : vector<8x80xf32>
    %37 = math.tanh %36 : vector<8x80xf32>
    %cst_16 = arith.constant 5.000000e-01 : f32
    %38 = vector.broadcast %cst_16 : f32 to vector<8x80xf32>
    %39 = arith.mulf %38, %37 : vector<8x80xf32>
    %cst_17 = arith.constant 5.000000e-01 : f32
    %40 = vector.broadcast %cst_17 : f32 to vector<8x80xf32>
    %41 = arith.addf %39, %40 : vector<8x80xf32>
    %42 = vector.extract_strided_slice %33 {offsets = [0, 80], sizes = [8, 80], strides = [1, 1]} : vector<8x256xf32> to vector<8x80xf32>
    %43 = math.tanh %42 : vector<8x80xf32>
    %44 = vector.extract_strided_slice %33 {offsets = [0, 160], sizes = [8, 80], strides = [1, 1]} : vector<8x256xf32> to vector<8x80xf32>
    %cst_18 = arith.constant 5.000000e-01 : f32
    %45 = vector.broadcast %cst_18 : f32 to vector<8x80xf32>
    %46 = arith.mulf %45, %44 : vector<8x80xf32>
    %47 = math.tanh %46 : vector<8x80xf32>
    %cst_19 = arith.constant 5.000000e-01 : f32
    %48 = vector.broadcast %cst_19 : f32 to vector<8x80xf32>
    %49 = arith.mulf %48, %47 : vector<8x80xf32>
    %cst_20 = arith.constant 5.000000e-01 : f32
    %50 = vector.broadcast %cst_20 : f32 to vector<8x80xf32>
    %51 = arith.addf %49, %50 : vector<8x80xf32>
    %52 = arith.mulf %41, %43 : vector<8x80xf32>
    %53 = math.tanh %52 : vector<8x80xf32>
    %54 = arith.mulf %51, %53 : vector<8x80xf32>
    %55 = arith.truncf %54 : vector<8x80xf32> to vector<8x80xbf16>
    %c0_21 = arith.constant 0 : index
    %c256 = arith.constant 256 : index
    %56 = vector.load %arg4[%c0_21, %c256] : memref<80x384xbf16, #tpu.memory_space<vmem>>, vector<80x128xbf16>
    %cst_22 = arith.constant dense<0.000000e+00> : vector<8x128xf32>
    %57 = tpu.matmul %55, %56, %cst_22 {dimension_numbers = #tpu.dot_dimension_numbers<[1], [0], [0], [1], [0, 0, 1, 1], [], []>} : vector<8x80xbf16>, vector<80x128xbf16>, vector<8x128xf32> -> vector<8x128xf32>
    %c2 = arith.constant 2 : index
    %c0_23 = arith.constant 0 : index
    %58 = vector.load %arg5[%c2, %c0_23] : memref<8x384xf32, #tpu.memory_space<vmem>>, vector<1x128xf32>
    %59 = vector.broadcast %58 : vector<1x128xf32> to vector<8x128xf32>
    %60 = arith.addf %57, %59 : vector<8x128xf32>
    %61 = tpu.iota {dimensions = array<i32: 1>} : vector<8x128xi32>
    %c20_i32 = arith.constant 20 : i32
    %62 = vector.broadcast %c20_i32 : i32 to vector<8x128xi32>
    %63 = arith.cmpi slt, %61, %62 : vector<8x128xi32>
    %cst_24 = arith.constant 0xFF800000 : f32
    %64 = vector.broadcast %cst_24 : f32 to vector<8x128xf32>
    %65 = arith.select %63, %60, %64 : vector<8x128xi1>, vector<8x128xf32>
    %cst_25 = arith.constant dense<0xFF800000> : vector<8xf32>
    %66 = vector.multi_reduction <maximumf>, %65, %cst_25 [1] : vector<8x128xf32> to vector<8xf32>
    %67 = vector.shape_cast %66 : vector<8xf32> to vector<8x1xf32>
    %68 = vector.broadcast %67 : vector<8x1xf32> to vector<8x128xf32>
    %69 = arith.subf %60, %68 : vector<8x128xf32>
    %70 = math.exp %69 : vector<8x128xf32>
    %cst_26 = arith.constant 0.000000e+00 : f32
    %71 = vector.broadcast %cst_26 : f32 to vector<8x128xf32>
    %72 = arith.select %63, %70, %71 : vector<8x128xi1>, vector<8x128xf32>
    %cst_27 = arith.constant dense<0.000000e+00> : vector<8xf32>
    %73 = vector.multi_reduction <add>, %72, %cst_27 [1] : vector<8x128xf32> to vector<8xf32>
    %74 = vector.shape_cast %73 : vector<8xf32> to vector<8x1xf32>
    %75 = math.log %74 : vector<8x1xf32>
    %76 = vector.broadcast %75 : vector<8x1xf32> to vector<8x128xf32>
    %77 = arith.subf %69, %76 : vector<8x128xf32>
    %78 = vector.broadcast %74 : vector<8x1xf32> to vector<8x128xf32>
    %79 = arith.divf %72, %78 : vector<8x128xf32>
    %c20_i32_28 = arith.constant 20 : i32
    %80 = vector.broadcast %c20_i32_28 : i32 to vector<8x128xi32>
    %81 = arith.cmpi eq, %61, %80 : vector<8x128xi32>
    %c0_29 = arith.constant 0 : index
    %c0_30 = arith.constant 0 : index
    %82 = vector.load %arg2[%c0_29, %c0_30] : memref<8x1xf32, #tpu.memory_space<vmem>>, vector<8x1xf32>
    %c21_i32 = arith.constant 21 : i32
    %83 = vector.broadcast %c21_i32 : i32 to vector<8x128xi32>
    %84 = arith.cmpi eq, %61, %83 : vector<8x128xi32>
    %cst_31 = arith.constant 1.000000e+00 : f32
    %cst_32 = arith.constant 0.000000e+00 : f32
    %85 = vector.broadcast %cst_31 : f32 to vector<8x128xf32>
    %86 = vector.broadcast %cst_32 : f32 to vector<8x128xf32>
    %87 = arith.select %84, %85, %86 : vector<8x128xi1>, vector<8x128xf32>
    %88 = vector.shape_cast %82 : vector<8x1xf32> to vector<8x1xf32>
    %89 = vector.broadcast %88 : vector<8x1xf32> to vector<8x128xf32>
    %90 = arith.select %81, %89, %87 : vector<8x128xi1>, vector<8x128xf32>
    %91 = arith.addf %79, %90 : vector<8x128xf32>
    %c3 = arith.constant 3 : index
    %c0_33 = arith.constant 0 : index
    %92 = vector.load %arg5[%c3, %c0_33] : memref<8x384xf32, #tpu.memory_space<vmem>>, vector<1x128xf32>
    %93 = vector.broadcast %92 : vector<1x128xf32> to vector<8x128xf32>
    %94 = arith.mulf %91, %93 : vector<8x128xf32>
    %cst_34 = arith.constant dense<0.000000e+00> : vector<8xf32>
    %95 = vector.multi_reduction <add>, %94, %cst_34 [1] : vector<8x128xf32> to vector<8xf32>
    %96 = vector.shape_cast %95 : vector<8xf32> to vector<8x1xf32>
    %c20_i32_35 = arith.constant 20 : i32
    %97 = vector.broadcast %c20_i32_35 : i32 to vector<8x128xi32>
    %98 = arith.cmpi eq, %61, %97 : vector<8x128xi32>
    %cst_36 = arith.constant 0.000000e+00 : f32
    %99 = vector.shape_cast %96 : vector<8x1xf32> to vector<8x1xf32>
    %100 = vector.broadcast %99 : vector<8x1xf32> to vector<8x128xf32>
    %101 = vector.broadcast %cst_36 : f32 to vector<8x128xf32>
    %102 = arith.select %98, %100, %101 : vector<8x128xi1>, vector<8x128xf32>
    %103 = arith.select %63, %77, %102 : vector<8x128xi1>, vector<8x128xf32>
    %c0_37 = arith.constant 0 : index
    %c0_38 = arith.constant 0 : index
    %104 = vector.load %arg6[%c0_37, %c0_38] : memref<8x128xf32, #tpu.memory_space<vmem>>, vector<8x128xf32>
    tpu.vector_store %arg6[%c0_37, %c0_38], %103 {strides = array<i32>} : memref<8x128xf32, #tpu.memory_space<vmem>>, vector<8x128xf32>,
    return
  }
  func.func @transform_0(%arg0: i32) -> (i32, i32) {
    %c0_i32 = arith.constant 0 : i32
    %c0_i32_0 = arith.constant 0 : i32
    return %arg0, %c0_i32 : i32, i32
  }
  func.func @transform_1(%arg0: i32) -> (i32, i32) {
    %c0_i32 = arith.constant 0 : i32
    %c0_i32_0 = arith.constant 0 : i32
    return %arg0, %c0_i32 : i32, i32
  }
  func.func @transform_2(%arg0: i32) -> (i32, i32) {
    %c0_i32 = arith.constant 0 : i32
    %c0_i32_0 = arith.constant 0 : i32
    %c0_i32_1 = arith.constant 0 : i32
    return %c0_i32, %c0_i32_0 : i32, i32
  }
  func.func @transform_3(%arg0: i32) -> (i32, i32) {
    %c0_i32 = arith.constant 0 : i32
    %c0_i32_0 = arith.constant 0 : i32
    %c0_i32_1 = arith.constant 0 : i32
    return %c0_i32, %c0_i32_0 : i32, i32
  }
  func.func @transform_4(%arg0: i32) -> (i32, i32) {
    %c0_i32 = arith.constant 0 : i32
    %c0_i32_0 = arith.constant 0 : i32
    %c0_i32_1 = arith.constant 0 : i32
    return %c0_i32, %c0_i32_0 : i32, i32
  }
  func.func @transform_5(%arg0: i32) -> (i32, i32) {
    %c0_i32 = arith.constant 0 : i32
    %c0_i32_0 = arith.constant 0 : i32
    return %arg0, %c0_i32 : i32, i32
  }
}

</mosaic_0001>

<llo_original>
// kernel: tpu_custom_call.1
$region0: #{tpu_custom_call.1}
  #allocation0 [shape = 'u32[]', space=smem, size = 0x4, offset = 0x4, fixed_abs, tag = 'smem constant byte address 0x4 - core index']
  #allocation1 [shape = 'u32[144,128]{1,0:T(1,128)}', space=vmem, size = 0x12000, scoped, tag = 'internal scratch']
  %s0 = inlined_call_operand.hbm [shape: f32[16,672], index: 0, kind: input, shape index: {}]
  %s1 = inlined_call_operand.vmem [shape: f32[16,1], index: 1, kind: input, shape index: {}]
  %s2 = inlined_call_operand.hbm [shape: bf16[672,256], index: 2, kind: input, shape index: {}]
  %s3 = inlined_call_operand.hbm [shape: bf16[80,384], index: 3, kind: input, shape index: {}]
  %s4 = inlined_call_operand.vmem [shape: f32[8,384], index: 4, kind: input, shape index: {}]
  %s5 = inlined_call_operand.hbm [shape: f32[16,128], index: 5, kind: output, shape index: {}]
  %s6 = sld [smem:[#allocation0]]
  $region65: #{tpu_custom_call.1} parent=0
    _
  %s8 = ssub.s32 1, %s6
  %s9 = scalar_select 0, %s8, %s6
  $region1: #{tpu_custom_call.1} parent=0
    #allocation2 [shape = 'u8[49152]{0}', space=vmem, size = 0xc000, scoped, tag = 'input window, operand 0']
    #allocation3 [shape = 's32[2]{0}', space=sflag, size = 0x8, scoped, tag = 'scoped memory for tpu_custom_call.1']
    #allocation4 [shape = 's32[2]{0}', space=sflag, size = 0x8, scoped, tag = 'scoped memory for tpu_custom_call.1']
    #allocation5 [shape = 'u8[344064]{0}', space=vmem, size = 0x54000, scoped, tag = 'input window, operand 2, single buffered']
    #allocation6 [shape = 's32[1]{0}', space=sflag, size = 0x4, scoped, tag = 'scoped memory for tpu_custom_call.1']
    #allocation7 [shape = 'u8[61440]{0}', space=vmem, size = 0xf000, scoped, tag = 'input window, operand 3, single buffered']
    #allocation8 [shape = 'u8[8192]{0}', space=vmem, size = 0x2000, scoped, tag = 'output window, operand 0']
    %10 = vsyncpa [#allocation3], 0
    %s11 = scalar_lea.sflag [#allocation3], 1
    %12 = vsyncpa %s11, 0
    %13 = vsyncpa [#allocation6], 0
    %14 = vsyncpa [#allocation4], 0
    %s15 = scalar_lea.sflag [#allocation4], 1
    %16 = vsyncpa %s15, 0
    loop: start=0, step=1, limit=4
    $region2: #{tpu_custom_call.1} parent=1 // loop_pre_header
      _
    $region3: #{tpu_custom_call.1} parent=1 // loop_header
      %s18 = sphi 0, %s22
      %p19 = scmp.ge.s32.totalorder %s18, 4
      %s28 = sphi 0, %s30
      %s31 = sphi 0, %s28
      %s32 = sphi 0, %s31
      %s48 = sphi 0, %s32
      %s54 = sphi 0, %s56
      %s57 = sphi 0, %s54
      %s58 = sphi 0, %s57
      %s74 = sphi 0, %s58
      %s78 = sphi 0, %s78
      %s80 = sphi 0, %s78
      %s81 = sphi 0, %s80
      %s95 = sphi 0, %s81
      %s99 = sphi 0, %s99
      %s101 = sphi 0, %s99
      %s102 = sphi 0, %s101
      %s116 = sphi 0, %s102
      %s120 = sphi 0, %s120
      %s122 = sphi 0, %s120
      %s123 = sphi 0, %s122
      %s137 = sphi 0, %s123
      %s143 = sphi 0, %s145
      %s146 = sphi 0, %s143
      %s147 = sphi 0, %s146
      %s163 = sphi 0, %s147
    $region4: #{tpu_custom_call.1} parent=1 // loop_header_branch
      %21 = sbr.rel (%p19) target = $region8
    $region5: #{tpu_custom_call.1} parent=1 // loop_body
      %s23 = ssub.s32 %s18, 1
      %s24 = ssub.s32 %s18, 2
      %s25 = sadd.s32 %s18, 1
      %s26 = ssub.s32 %s18, %s25
      %p27 = scmp.eq.s32.totalorder %s26, 0
      %s29 = sadd.s32 %s28, 1
      %s30 = scalar_select %p27, %s28, %s29
      %p33 = pneg %p27
      %p34 = scmp.eq.s32.totalorder %s18, 1
      %p35 = por %p33, %p34
      %p36 = scmp.ne.s32.totalorder %s28, %s31
      %p37 = scmp.eq.s32.totalorder %s18, 0
      %p38 = por %p36, %p37
      %p39 = scmp.ne.s32.totalorder %s28, %s31
      %p40 = scmp.eq.s32.totalorder %s23, 1
      %p41 = por %p39, %p40
      %p42 = scmp.ne.s32.totalorder %s31, %s32
      %p43 = scmp.eq.s32.totalorder %s23, 0
      %p44 = por %p42, %p43
      %p45 = scmp.ne.s32.totalorder %s31, %s32
      %p46 = scmp.eq.s32.totalorder %s24, 1
      %p47 = por %p45, %p46
      %p49 = scmp.ne.s32.totalorder %s32, %s48
      %p50 = scmp.eq.s32.totalorder %s24, 0
      %p51 = por %p49, %p50
      %s52 = ssub.s32 %s18, %s25
      %p53 = scmp.eq.s32.totalorder %s52, 0
      %s55 = sadd.s32 %s54, 1
      %s56 = scalar_select %p53, %s54, %s55
      %p59 = pneg %p53
      %p60 = scmp.eq.s32.totalorder %s18, 1
      %p61 = por %p59, %p60
      %p62 = scmp.ne.s32.totalorder %s54, %s57
      %p63 = scmp.eq.s32.totalorder %s18, 0
      %p64 = por %p62, %p63
      %p65 = scmp.ne.s32.totalorder %s54, %s57
      %p66 = scmp.eq.s32.totalorder %s23, 1
      %p67 = por %p65, %p66
      %p68 = scmp.ne.s32.totalorder %s57, %s58
      %p69 = scmp.eq.s32.totalorder %s23, 0
      %p70 = por %p68, %p69
      %p71 = scmp.ne.s32.totalorder %s57, %s58
      %p72 = scmp.eq.s32.totalorder %s24, 1
      %p73 = por %p71, %p72
      %p75 = scmp.ne.s32.totalorder %s58, %s74
      %p76 = scmp.eq.s32.totalorder %s24, 0
      %p77 = por %p75, %p76
      %s79 = sadd.s32 %s78, 1
      %p82 = scmp.eq.s32.totalorder %s18, 1
      %p83 = scmp.ne.s32.totalorder %s78, %s80
      %p84 = scmp.eq.s32.totalorder %s18, 0
      %p85 = por %p83, %p84
      %p86 = scmp.ne.s32.totalorder %s78, %s80
      %p87 = scmp.eq.s32.totalorder %s23, 1
      %p88 = por %p86, %p87
      %p89 = scmp.ne.s32.totalorder %s80, %s81
      %p90 = scmp.eq.s32.totalorder %s23, 0
      %p91 = por %p89, %p90
      %p92 = scmp.ne.s32.totalorder %s80, %s81
      %p93 = scmp.eq.s32.totalorder %s24, 1
      %p94 = por %p92, %p93
      %p96 = scmp.ne.s32.totalorder %s81, %s95
      %p97 = scmp.eq.s32.totalorder %s24, 0
      %p98 = por %p96, %p97
      %s100 = sadd.s32 %s99, 1
      %p103 = scmp.eq.s32.totalorder %s18, 1
      %p104 = scmp.ne.s32.totalorder %s99, %s101
      %p105 = scmp.eq.s32.totalorder %s18, 0
      %p106 = por %p104, %p105
      %p107 = scmp.ne.s32.totalorder %s99, %s101
      %p108 = scmp.eq.s32.totalorder %s23, 1
      %p109 = por %p107, %p108
      %p110 = scmp.ne.s32.totalorder %s101, %s102
      %p111 = scmp.eq.s32.totalorder %s23, 0
      %p112 = por %p110, %p111
      %p113 = scmp.ne.s32.totalorder %s101, %s102
      %p114 = scmp.eq.s32.totalorder %s24, 1
      %p115 = por %p113, %p114
      %p117 = scmp.ne.s32.totalorder %s102, %s116
      %p118 = scmp.eq.s32.totalorder %s24, 0
      %p119 = por %p117, %p118
      %s121 = sadd.s32 %s120, 1
      %p124 = scmp.eq.s32.totalorder %s18, 1
      %p125 = scmp.ne.s32.totalorder %s120, %s122
      %p126 = scmp.eq.s32.totalorder %s18, 0
      %p127 = por %p125, %p126
      %p128 = scmp.ne.s32.totalorder %s120, %s122
      %p129 = scmp.eq.s32.totalorder %s23, 1
      %p130 = por %p128, %p129
      %p131 = scmp.ne.s32.totalorder %s122, %s123
      %p132 = scmp.eq.s32.totalorder %s23, 0
      %p133 = por %p131, %p132
      %p134 = scmp.ne.s32.totalorder %s122, %s123
      %p135 = scmp.eq.s32.totalorder %s24, 1
      %p136 = por %p134, %p135
      %p138 = scmp.ne.s32.totalorder %s123, %s137
      %p139 = scmp.eq.s32.totalorder %s24, 0
      %p140 = por %p138, %p139
      %s141 = ssub.s32 %s18, %s25
      %p142 = scmp.eq.s32.totalorder %s141, 0
      %s144 = sadd.s32 %s143, 1
      %s145 = scalar_select %p142, %s143, %s144
      %p148 = pneg %p142
      %p149 = scmp.eq.s32.totalorder %s18, 1
      %p150 = por %p148, %p149
      %p151 = scmp.ne.s32.totalorder %s143, %s146
      %p152 = scmp.eq.s32.totalorder %s18, 0
      %p153 = por %p151, %p152
      %p154 = scmp.ne.s32.totalorder %s143, %s146
      %p155 = scmp.eq.s32.totalorder %s23, 1
      %p156 = por %p154, %p155
      %p157 = scmp.ne.s32.totalorder %s146, %s147
      %p158 = scmp.eq.s32.totalorder %s23, 0
      %p159 = por %p157, %p158
      %p160 = scmp.ne.s32.totalorder %s146, %s147
      %p161 = scmp.eq.s32.totalorder %s24, 1
      %p162 = por %p160, %p161
      %p164 = scmp.ne.s32.totalorder %s147, %s163
      %p165 = scmp.eq.s32.totalorder %s24, 0
      %p166 = por %p164, %p165
      %p167 = scmp.le.s32.totalorder 1, %s18
      %p168 = scmp.lt.s32.totalorder %s18, 3
      %p169 = pnand %p167, %p168
      %p170 = pneg %p169
      // Predicated region
      $region9: #{tpu_custom_call.1} parent=5 // pred_check
        _
      $region10: #{tpu_custom_call.1} parent=5 // pred_check_branch
        %172 = sbr.rel (%p169) target = $region12
      $region11: #{tpu_custom_call.1} parent=5 // pred_region
        %s173 = ssub.s32 %s18, 1
        // Predicated region
        $region13: #{tpu_custom_call.1} parent=11 // pred_check
          %p174 = pneg %p91
        $region14: #{tpu_custom_call.1} parent=11 // pred_check_branch
          %176 = sbr.rel (%p174) target = $region16
        $region15: #{tpu_custom_call.1} parent=11 // pred_region
          %s178 = ssub.s32 10752, 10752
          %179 = vsyncadd [#allocation6], %s178
          %s180 = sshll.u32 [#allocation5], 4
          %s181 = int_to_ptr.vmem [resolvable:$true] %s180
          %186 = dma.hbm_to_vmem [thread:$0]  %s2, 10752, %s181, [#allocation6], 128, 128, 8
        $region16: #{tpu_custom_call.1} parent=11 // pred_fallthru
          _
        // Predicated region
        $region17: #{tpu_custom_call.1} parent=11 // pred_check
          %p187 = pneg %p112
        $region18: #{tpu_custom_call.1} parent=11 // pred_check_branch
          %189 = sbr.rel (%p187) target = $region20
        $region19: #{tpu_custom_call.1} parent=11 // pred_region
          %s191 = ssub.s32 1920, 1920
          %192 = vsyncadd [#allocation6], %s191
          %s193 = sshll.u32 [#allocation7], 4
          %s194 = int_to_ptr.vmem [resolvable:$true] %s193
          %199 = dma.hbm_to_vmem [thread:$0]  %s3, 1920, %s194, [#allocation6], 192, 192, 12
        $region20: #{tpu_custom_call.1} parent=11 // pred_fallthru
          _
        // Predicated region
        $region21: #{tpu_custom_call.1} parent=11 // pred_check
          %p200 = pneg %p133
        $region22: #{tpu_custom_call.1} parent=11 // pred_check_branch
          %202 = sbr.rel (%p200) target = $region24
        $region23: #{tpu_custom_call.1} parent=11 // pred_region
          _
        $region24: #{tpu_custom_call.1} parent=11 // pred_fallthru
          _
      $region12: #{tpu_custom_call.1} parent=5 // pred_fallthru
        _
      %p203 = scmp.lt.s32.totalorder %s18, 2
      // Predicated region
      $region25: #{tpu_custom_call.1} parent=5 // pred_check
        %p204 = pneg %p203
      $region26: #{tpu_custom_call.1} parent=5 // pred_check_branch
        %206 = sbr.rel (%p204) target = $region28
      $region27: #{tpu_custom_call.1} parent=5 // pred_region
        // Predicated region
        $region29: #{tpu_custom_call.1} parent=27 // pred_check
          %p207 = pneg %p38
        $region30: #{tpu_custom_call.1} parent=27 // pred_check_branch
          %209 = sbr.rel (%p207) target = $region32
        $region31: #{tpu_custom_call.1} parent=27 // pred_region
          %s210 = sand.u32 %s28, 1
          %s211 = scalar_lea.sflag [#allocation3], %s210
          %s212 = sand.u32 %s28, 1
          %s213 = smul.addr %s212, 48
          %s214 = scalar_lea.vmem [#allocation2], %s213
          %s216 = ssub.s32 768, 768
          %217 = vsyncadd %s211, %s216
          %s218 = smul.addr %s18, 6
          %s219 = smul.addr %s218, 128
          %s220 = scalar_lea.hbm %s0, %s219
          %s222 = sshll.u32 %s214, 4
          %s223 = int_to_ptr.vmem [resolvable:$true] %s222
          %225 = dma.hbm_to_vmem [thread:$0]  %s220, 768, %s223, %s211
        $region32: #{tpu_custom_call.1} parent=27 // pred_fallthru
          _
        // Predicated region
        $region33: #{tpu_custom_call.1} parent=27 // pred_check
          %p226 = pneg %p64
        $region34: #{tpu_custom_call.1} parent=27 // pred_check_branch
          %228 = sbr.rel (%p226) target = $region36
        $region35: #{tpu_custom_call.1} parent=27 // pred_region
          %p229 = scmp.lt.s32.totalorder %s18, 1
          %s230 = scalar_select %p229, %s18, 1
          %s231 = smul.addr %s230, 8
          %s232 = scalar_lea.vmem %s1, %s231
        $region36: #{tpu_custom_call.1} parent=27 // pred_fallthru
          _
      $region28: #{tpu_custom_call.1} parent=5 // pred_fallthru
        _
      %p233 = scmp.le.s32.totalorder 1, %s18
      %p234 = scmp.lt.s32.totalorder %s18, 3
      %p235 = pnand %p233, %p234
      %p236 = pneg %p235
      // Predicated region
      $region37: #{tpu_custom_call.1} parent=5 // pred_check
        _
      $region38: #{tpu_custom_call.1} parent=5 // pred_check_branch
        %238 = sbr.rel (%p235) target = $region40
      $region39: #{tpu_custom_call.1} parent=5 // pred_region
        %s239 = ssub.s32 %s18, 1
        %s240 = sand.u32 %s31, 1
        %s241 = scalar_lea.sflag [#allocation3], %s240
        %s242 = sand.u32 %s31, 1
        %s243 = smul.addr %s242, 48
        %s244 = scalar_lea.vmem [#allocation2], %s243
        // Predicated region
        $region41: #{tpu_custom_call.1} parent=39 // pred_check
          %p245 = pneg %p44
        $region42: #{tpu_custom_call.1} parent=39 // pred_check_branch
          %247 = sbr.rel (%p245) target = $region44
        $region43: #{tpu_custom_call.1} parent=39 // pred_region
          %248 = dma.done %s241, 768
        $region44: #{tpu_custom_call.1} parent=39 // pred_fallthru
          _
        // Predicated region
        $region45: #{tpu_custom_call.1} parent=39 // pred_check
          %p249 = pneg %p91
        $region46: #{tpu_custom_call.1} parent=39 // pred_check_branch
          %251 = sbr.rel (%p249) target = $region48
        $region47: #{tpu_custom_call.1} parent=39 // pred_region
          %252 = dma.done [#allocation6], 10752
        $region48: #{tpu_custom_call.1} parent=39 // pred_fallthru
          _
        // Predicated region
        $region49: #{tpu_custom_call.1} parent=39 // pred_check
          %p253 = pneg %p112
        $region50: #{tpu_custom_call.1} parent=39 // pred_check_branch
          %255 = sbr.rel (%p253) target = $region52
        $region51: #{tpu_custom_call.1} parent=39 // pred_region
          %256 = dma.done [#allocation6], 1920
        $region52: #{tpu_custom_call.1} parent=39 // pred_fallthru
          _
        %s257 = sand.u32 %s31, 1
        %s258 = scalar_lea.sflag [#allocation3], %s257
        %s259 = sand.u32 %s31, 1
        %s260 = smul.addr %s259, 48
        %s261 = scalar_lea.vmem [#allocation2], %s260
        %p262 = pneg %p44
        %p263 = pneg %p41
        %p264 = scmp.lt.s32.totalorder %s23, 1
        %s265 = scalar_select %p264, %s23, 1
        %s266 = smul.addr %s265, 8
        %s267 = scalar_lea.vmem %s1, %s266
        %p268 = pneg %p70
        %p269 = pneg %p67
        %p270 = pneg %p91
        %p271 = pneg %p88
        %p272 = pneg %p112
        %p273 = pneg %p109
        %p274 = pneg %p133
        %p275 = pneg %p130
        %p276 = pneg %p159
        %p277 = pneg %p156
        %s278 = sand.u32 %s146, 1
        %s279 = scalar_lea.sflag [#allocation4], %s278
        %s280 = sand.u32 %s146, 1
        %s281 = smul.addr %s280, 8
        %s282 = scalar_lea.vmem [#allocation8], %s281
        %p283 = scmp.lt.s32.totalorder %s23, 1
        %s284 = scalar_select %p283, %s23, 1
        %s285 = smul.addr %s284, 8
        %s286 = scalar_lea.vmem %s1, %s285
        %v288 = vld [vmem:[%s244] sm:$0xff]
        %v289 = vld [vmem:[%s244 + $0x8] sm:$0xff]
        %v290 = vld [vmem:[%s244 + $0x10] sm:$0xff]
        %v291 = vld [vmem:[%s244 + $0x18] sm:$0xff]
        %v292 = vld [vmem:[%s244 + $0x20] sm:$0xff]
        %v293 = vld [vmem:[%s244 + $0x28] sm:$0xff]
        %v294 = vpack.c.bf16 %v288, %v288
        %v295 = vpack.c.bf16 %v289, %v289
        %v296 = vpack.c.bf16 %v290, %v290
        %v297 = vpack.c.bf16 %v291, %v291
        %v298 = vpack.c.bf16 %v292, %v292
        %v299 = vpack.c.bf16 %v293, %v293
        %v300 = vld [vmem:[#allocation5] sm:$0xff]
        %v301 = vld [vmem:[#allocation5 + $0x8] sm:$0xff]
        %v302 = vld [vmem:[#allocation5 + $0x10] sm:$0xff]
        %v303 = vld [vmem:[#allocation5 + $0x18] sm:$0xff]
        %v304 = vld [vmem:[#allocation5 + $0x20] sm:$0xff]
        %v305 = vld [vmem:[#allocation5 + $0x28] sm:$0xff]
        %v306 = vld [vmem:[#allocation5 + $0x30] sm:$0xff]
        %v307 = vld [vmem:[#allocation5 + $0x38] sm:$0xff]
        %v308 = vld [vmem:[#allocation5 + $0x40] sm:$0xff]
        %v309 = vld [vmem:[#allocation5 + $0x48] sm:$0xff]
        %v310 = vld [vmem:[#allocation5 + $0x50] sm:$0xff]
        %v311 = vld [vmem:[#allocation5 + $0x58] sm:$0xff]
        %v312 = vld [vmem:[#allocation5 + $0x60] sm:$0xff]
        %v313 = vld [vmem:[#allocation5 + $0x68] sm:$0xff]
        %v314 = vld [vmem:[#allocation5 + $0x70] sm:$0xff]
        %v315 = vld [vmem:[#allocation5 + $0x78] sm:$0xff]
        %v316 = vld [vmem:[#allocation5 + $0x80] sm:$0xff]
        %v317 = vld [vmem:[#allocation5 + $0x88] sm:$0xff]
        %v318 = vld [vmem:[#allocation5 + $0x90] sm:$0xff]
        %v319 = vld [vmem:[#allocation5 + $0x98] sm:$0xff]
        %v320 = vld [vmem:[#allocation5 + $0xa0] sm:$0xff]
        %v321 = vld [vmem:[#allocation5 + $0xa8] sm:$0xff]
        %v322 = vld [vmem:[#allocation5 + $0xb0] sm:$0xff]
        %v323 = vld [vmem:[#allocation5 + $0xb8] sm:$0xff]
        %v324 = vld [vmem:[#allocation5 + $0xc0] sm:$0xff]
        %v325 = vld [vmem:[#allocation5 + $0xc8] sm:$0xff]
        %v326 = vld [vmem:[#allocation5 + $0xd0] sm:$0xff]
        %v327 = vld [vmem:[#allocation5 + $0xd8] sm:$0xff]
        %v328 = vld [vmem:[#allocation5 + $0xe0] sm:$0xff]
        %v329 = vld [vmem:[#allocation5 + $0xe8] sm:$0xff]
        %v330 = vld [vmem:[#allocation5 + $0xf0] sm:$0xff]
        %v331 = vld [vmem:[#allocation5 + $0xf8] sm:$0xff]
        %v332 = vld [vmem:[#allocation5 + $0x100] sm:$0xff]
        %v333 = vld [vmem:[#allocation5 + $0x108] sm:$0xff]
        %v334 = vld [vmem:[#allocation5 + $0x110] sm:$0xff]
        %v335 = vld [vmem:[#allocation5 + $0x118] sm:$0xff]
        %v336 = vld [vmem:[#allocation5 + $0x120] sm:$0xff]
        %v337 = vld [vmem:[#allocation5 + $0x128] sm:$0xff]
        %v338 = vld [vmem:[#allocation5 + $0x130] sm:$0xff]
        %v339 = vld [vmem:[#allocation5 + $0x138] sm:$0xff]
        %v340 = vld [vmem:[#allocation5 + $0x140] sm:$0xff]
        %v341 = vld [vmem:[#allocation5 + $0x148] sm:$0xff]
        %v342 = vld [vmem:[#allocation5 + $0x150] sm:$0xff]
        %v343 = vld [vmem:[#allocation5 + $0x158] sm:$0xff]
        %v344 = vld [vmem:[#allocation5 + $0x160] sm:$0xff]
        %v345 = vld [vmem:[#allocation5 + $0x168] sm:$0xff]
        %v346 = vld [vmem:[#allocation5 + $0x170] sm:$0xff]
        %v347 = vld [vmem:[#allocation5 + $0x178] sm:$0xff]
        %v348 = vld [vmem:[#allocation5 + $0x180] sm:$0xff]
        %v349 = vld [vmem:[#allocation5 + $0x188] sm:$0xff]
        %v350 = vld [vmem:[#allocation5 + $0x190] sm:$0xff]
        %v351 = vld [vmem:[#allocation5 + $0x198] sm:$0xff]
        %v352 = vld [vmem:[#allocation5 + $0x1a0] sm:$0xff]
        %v353 = vld [vmem:[#allocation5 + $0x1a8] sm:$0xff]
        %v354 = vld [vmem:[#allocation5 + $0x1b0] sm:$0xff]
        %v355 = vld [vmem:[#allocation5 + $0x1b8] sm:$0xff]
        %v356 = vld [vmem:[#allocation5 + $0x1c0] sm:$0xff]
        %v357 = vld [vmem:[#allocation5 + $0x1c8] sm:$0xff]
        %v358 = vld [vmem:[#allocation5 + $0x1d0] sm:$0xff]
        %v359 = vld [vmem:[#allocation5 + $0x1d8] sm:$0xff]
        %v360 = vld [vmem:[#allocation5 + $0x1e0] sm:$0xff]
        %v361 = vld [vmem:[#allocation5 + $0x1e8] sm:$0xff]
        %v362 = vld [vmem:[#allocation5 + $0x1f0] sm:$0xff]
        %v363 = vld [vmem:[#allocation5 + $0x1f8] sm:$0xff]
        %v364 = vld [vmem:[#allocation5 + $0x200] sm:$0xff]
        %v365 = vld [vmem:[#allocation5 + $0x208] sm:$0xff]
        %v366 = vld [vmem:[#allocation5 + $0x210] sm:$0xff]
        %v367 = vld [vmem:[#allocation5 + $0x218] sm:$0xff]
        %v368 = vld [vmem:[#allocation5 + $0x220] sm:$0xff]
        %v369 = vld [vmem:[#allocation5 + $0x228] sm:$0xff]
        %v370 = vld [vmem:[#allocation5 + $0x230] sm:$0xff]
        %v371 = vld [vmem:[#allocation5 + $0x238] sm:$0xff]
        %v372 = vld [vmem:[#allocation5 + $0x240] sm:$0xff]
        %v373 = vld [vmem:[#allocation5 + $0x248] sm:$0xff]
        %v374 = vld [vmem:[#allocation5 + $0x250] sm:$0xff]
        %v375 = vld [vmem:[#allocation5 + $0x258] sm:$0xff]
        %v376 = vld [vmem:[#allocation5 + $0x260] sm:$0xff]
        %v377 = vld [vmem:[#allocation5 + $0x268] sm:$0xff]
        %v378 = vld [vmem:[#allocation5 + $0x270] sm:$0xff]
        %v379 = vld [vmem:[#allocation5 + $0x278] sm:$0xff]
        %v380 = vld [vmem:[#allocation5 + $0x280] sm:$0xff]
        %v381 = vld [vmem:[#allocation5 + $0x288] sm:$0xff]
        %v382 = vld [vmem:[#allocation5 + $0x290] sm:$0xff]
        %v383 = vld [vmem:[#allocation5 + $0x298] sm:$0xff]
        %v384 = vld [vmem:[%s4] ss:$8 sm:$0x3]
        %v386 = vlaneseq
        %v387 = vshrl.u32 %v386, 7
        %v388 = vsub.s32 0, %v387
        %v389 = vrot.slane %v384, %v388
        %v390 = vlaneseq
        %v391 = vshrl.u32 %v390, 7
        %v392 = vsub.s32 1, %v391
        %v393 = vrot.slane %v384, %v392
        %v480 = vunpack.c.l.b16 %v300
        %v481 = vunpack.c.h.b16 %v300
        %v482 = vunpack.c.l.b16 %v301
        %v483 = vunpack.c.h.b16 %v301
        %v484 = vunpack.c.l.b16 %v302
        %v485 = vunpack.c.h.b16 %v302
        %v486 = vunpack.c.l.b16 %v303
        %v487 = vunpack.c.h.b16 %v303
        %v488 = vunpack.c.l.b16 %v304
        %v489 = vunpack.c.h.b16 %v304
        %v490 = vunpack.c.l.b16 %v305
        %v491 = vunpack.c.h.b16 %v305
        %v492 = vunpack.c.l.b16 %v306
        %v493 = vunpack.c.h.b16 %v306
        %v494 = vunpack.c.l.b16 %v307
        %v495 = vunpack.c.h.b16 %v307
        %v496 = vunpack.c.l.b16 %v308
        %v497 = vunpack.c.h.b16 %v308
        %v498 = vunpack.c.l.b16 %v309
        %v499 = vunpack.c.h.b16 %v309
        %v500 = vunpack.c.l.b16 %v310
        %v501 = vunpack.c.h.b16 %v310
        %v502 = vunpack.c.l.b16 %v311
        %v503 = vunpack.c.h.b16 %v311
        %v504 = vunpack.c.l.b16 %v312
        %v505 = vunpack.c.h.b16 %v312
        %v506 = vunpack.c.l.b16 %v313
        %v507 = vunpack.c.h.b16 %v313
        %v508 = vunpack.c.l.b16 %v314
        %v509 = vunpack.c.h.b16 %v314
        %v510 = vunpack.c.l.b16 %v315
        %v511 = vunpack.c.h.b16 %v315
        %v512 = vunpack.c.l.b16 %v316
        %v513 = vunpack.c.h.b16 %v316
        %v514 = vunpack.c.l.b16 %v317
        %v515 = vunpack.c.h.b16 %v317
        %v516 = vunpack.c.l.b16 %v318
        %v517 = vunpack.c.h.b16 %v318
        %v518 = vunpack.c.l.b16 %v319
        %v519 = vunpack.c.h.b16 %v319
        %v520 = vunpack.c.l.b16 %v320
        %v521 = vunpack.c.h.b16 %v320
        %v522 = vunpack.c.l.b16 %v321
        %v523 = vunpack.c.h.b16 %v321
        %v524 = vunpack.c.l.b16 %v322
        %v525 = vunpack.c.h.b16 %v322
        %v526 = vunpack.c.l.b16 %v323
        %v527 = vunpack.c.h.b16 %v323
        %v528 = vunpack.c.l.b16 %v324
        %v529 = vunpack.c.h.b16 %v324
        %v530 = vunpack.c.l.b16 %v325
        %v531 = vunpack.c.h.b16 %v325
        %v532 = vunpack.c.l.b16 %v326
        %v533 = vunpack.c.h.b16 %v326
        %v534 = vunpack.c.l.b16 %v327
        %v535 = vunpack.c.h.b16 %v327
        %v536 = vunpack.c.l.b16 %v328
        %v537 = vunpack.c.h.b16 %v328
        %v538 = vunpack.c.l.b16 %v329
        %v539 = vunpack.c.h.b16 %v329
        %v540 = vunpack.c.l.b16 %v330
        %v541 = vunpack.c.h.b16 %v330
        %v542 = vunpack.c.l.b16 %v331
        %v543 = vunpack.c.h.b16 %v331
        %v544 = vunpack.c.l.b16 %v332
        %v545 = vunpack.c.h.b16 %v332
        %v546 = vunpack.c.l.b16 %v333
        %v547 = vunpack.c.h.b16 %v333
        %v548 = vunpack.c.l.b16 %v334
        %v549 = vunpack.c.h.b16 %v334
        %v550 = vunpack.c.l.b16 %v335
        %v551 = vunpack.c.h.b16 %v335
        %v552 = vunpack.c.l.b16 %v336
        %v553 = vunpack.c.h.b16 %v336
        %v554 = vunpack.c.l.b16 %v337
        %v555 = vunpack.c.h.b16 %v337
        %v556 = vunpack.c.l.b16 %v338
        %v557 = vunpack.c.h.b16 %v338
        %v558 = vunpack.c.l.b16 %v339
        %v559 = vunpack.c.h.b16 %v339
        %v560 = vunpack.c.l.b16 %v340
        %v561 = vunpack.c.h.b16 %v340
        %v562 = vunpack.c.l.b16 %v341
        %v563 = vunpack.c.h.b16 %v341
        %v564 = vunpack.c.l.b16 %v342
        %v565 = vunpack.c.h.b16 %v342
        %v566 = vunpack.c.l.b16 %v343
        %v567 = vunpack.c.h.b16 %v343
        %v568 = vunpack.c.l.b16 %v344
        %v569 = vunpack.c.h.b16 %v344
        %v570 = vunpack.c.l.b16 %v345
        %v571 = vunpack.c.h.b16 %v345
        %v572 = vunpack.c.l.b16 %v346
        %v573 = vunpack.c.h.b16 %v346
        %v574 = vunpack.c.l.b16 %v347
        %v575 = vunpack.c.h.b16 %v347
        %v576 = vunpack.c.l.b16 %v348
        %v577 = vunpack.c.h.b16 %v348
        %v578 = vunpack.c.l.b16 %v349
        %v579 = vunpack.c.h.b16 %v349
        %v580 = vunpack.c.l.b16 %v350
        %v581 = vunpack.c.h.b16 %v350
        %v582 = vunpack.c.l.b16 %v351
        %v583 = vunpack.c.h.b16 %v351
        %v584 = vunpack.c.l.b16 %v352
        %v585 = vunpack.c.h.b16 %v352
        %v586 = vunpack.c.l.b16 %v353
        %v587 = vunpack.c.h.b16 %v353
        %v588 = vunpack.c.l.b16 %v354
        %v589 = vunpack.c.h.b16 %v354
        %v590 = vunpack.c.l.b16 %v355
        %v591 = vunpack.c.h.b16 %v355
        %v592 = vunpack.c.l.b16 %v356
        %v593 = vunpack.c.h.b16 %v356
        %v594 = vunpack.c.l.b16 %v357
        %v595 = vunpack.c.h.b16 %v357
        %v596 = vunpack.c.l.b16 %v358
        %v597 = vunpack.c.h.b16 %v358
        %v598 = vunpack.c.l.b16 %v359
        %v599 = vunpack.c.h.b16 %v359
        %v600 = vunpack.c.l.b16 %v360
        %v601 = vunpack.c.h.b16 %v360
        %v602 = vunpack.c.l.b16 %v361
        %v603 = vunpack.c.h.b16 %v361
        %v604 = vunpack.c.l.b16 %v362
        %v605 = vunpack.c.h.b16 %v362
        %v606 = vunpack.c.l.b16 %v363
        %v607 = vunpack.c.h.b16 %v363
        %v608 = vunpack.c.l.b16 %v364
        %v609 = vunpack.c.h.b16 %v364
        %v610 = vunpack.c.l.b16 %v365
        %v611 = vunpack.c.h.b16 %v365
        %v612 = vunpack.c.l.b16 %v366
        %v613 = vunpack.c.h.b16 %v366
        %v614 = vunpack.c.l.b16 %v367
        %v615 = vunpack.c.h.b16 %v367
        %v616 = vunpack.c.l.b16 %v368
        %v617 = vunpack.c.h.b16 %v368
        %v618 = vunpack.c.l.b16 %v369
        %v619 = vunpack.c.h.b16 %v369
        %v620 = vunpack.c.l.b16 %v370
        %v621 = vunpack.c.h.b16 %v370
        %v622 = vunpack.c.l.b16 %v371
        %v623 = vunpack.c.h.b16 %v371
        %v624 = vunpack.c.l.b16 %v372
        %v625 = vunpack.c.h.b16 %v372
        %v626 = vunpack.c.l.b16 %v373
        %v627 = vunpack.c.h.b16 %v373
        %v628 = vunpack.c.l.b16 %v374
        %v629 = vunpack.c.h.b16 %v374
        %v630 = vunpack.c.l.b16 %v375
        %v631 = vunpack.c.h.b16 %v375
        %v632 = vunpack.c.l.b16 %v376
        %v633 = vunpack.c.h.b16 %v376
        %v634 = vunpack.c.l.b16 %v377
        %v635 = vunpack.c.h.b16 %v377
        %v636 = vunpack.c.l.b16 %v378
        %v637 = vunpack.c.h.b16 %v378
        %v638 = vunpack.c.l.b16 %v379
        %v639 = vunpack.c.h.b16 %v379
        %v640 = vunpack.c.l.b16 %v380
        %v641 = vunpack.c.h.b16 %v380
        %v642 = vunpack.c.l.b16 %v381
        %v643 = vunpack.c.h.b16 %v381
        %v644 = vunpack.c.l.b16 %v382
        %v645 = vunpack.c.h.b16 %v382
        %v646 = vunpack.c.l.b16 %v383
        %v647 = vunpack.c.h.b16 %v383
        %v648 = vpack.c.b16 %v482, %v480
        %v649 = vpack.c.b16 %v483, %v481
        %v650 = vpack.c.b16 %v486, %v484
        %v651 = vpack.c.b16 %v487, %v485
        %v652 = vpack.c.b16 %v490, %v488
        %v653 = vpack.c.b16 %v491, %v489
        %v654 = vpack.c.b16 %v494, %v492
        %v655 = vpack.c.b16 %v495, %v493
        %v656 = vpack.c.b16 %v498, %v496
        %v657 = vpack.c.b16 %v499, %v497
        %v658 = vpack.c.b16 %v502, %v500
        %v659 = vpack.c.b16 %v503, %v501
        %v660 = vpack.c.b16 %v506, %v504
        %v661 = vpack.c.b16 %v507, %v505
        %v662 = vpack.c.b16 %v510, %v508
        %v663 = vpack.c.b16 %v511, %v509
        %v664 = vpack.c.b16 %v514, %v512
        %v665 = vpack.c.b16 %v515, %v513
        %v666 = vpack.c.b16 %v518, %v516
        %v667 = vpack.c.b16 %v519, %v517
        %v668 = vpack.c.b16 %v522, %v520
        %v669 = vpack.c.b16 %v523, %v521
        %v670 = vpack.c.b16 %v526, %v524
        %v671 = vpack.c.b16 %v527, %v525
        %v672 = vpack.c.b16 %v530, %v528
        %v673 = vpack.c.b16 %v531, %v529
        %v674 = vpack.c.b16 %v534, %v532
        %v675 = vpack.c.b16 %v535, %v533
        %v676 = vpack.c.b16 %v538, %v536
        %v677 = vpack.c.b16 %v539, %v537
        %v678 = vpack.c.b16 %v542, %v540
        %v679 = vpack.c.b16 %v543, %v541
        %v680 = vpack.c.b16 %v546, %v544
        %v681 = vpack.c.b16 %v547, %v545
        %v682 = vpack.c.b16 %v550, %v548
        %v683 = vpack.c.b16 %v551, %v549
        %v684 = vpack.c.b16 %v554, %v552
        %v685 = vpack.c.b16 %v555, %v553
        %v686 = vpack.c.b16 %v558, %v556
        %v687 = vpack.c.b16 %v559, %v557
        %v688 = vpack.c.b16 %v562, %v560
        %v689 = vpack.c.b16 %v563, %v561
        %v690 = vpack.c.b16 %v566, %v564
        %v691 = vpack.c.b16 %v567, %v565
        %v692 = vpack.c.b16 %v570, %v568
        %v693 = vpack.c.b16 %v571, %v569
        %v694 = vpack.c.b16 %v574, %v572
        %v695 = vpack.c.b16 %v575, %v573
        %v696 = vpack.c.b16 %v578, %v576
        %v697 = vpack.c.b16 %v579, %v577
        %v698 = vpack.c.b16 %v582, %v580
        %v699 = vpack.c.b16 %v583, %v581
        %v700 = vpack.c.b16 %v586, %v584
        %v701 = vpack.c.b16 %v587, %v585
        %v702 = vpack.c.b16 %v590, %v588
        %v703 = vpack.c.b16 %v591, %v589
        %v704 = vpack.c.b16 %v594, %v592
        %v705 = vpack.c.b16 %v595, %v593
        %v706 = vpack.c.b16 %v598, %v596
        %v707 = vpack.c.b16 %v599, %v597
        %v708 = vpack.c.b16 %v602, %v600
        %v709 = vpack.c.b16 %v603, %v601
        %v710 = vpack.c.b16 %v606, %v604
        %v711 = vpack.c.b16 %v607, %v605
        %v712 = vpack.c.b16 %v610, %v608
        %v713 = vpack.c.b16 %v611, %v609
        %v714 = vpack.c.b16 %v614, %v612
        %v715 = vpack.c.b16 %v615, %v613
        %v716 = vpack.c.b16 %v618, %v616
        %v717 = vpack.c.b16 %v619, %v617
        %v718 = vpack.c.b16 %v622, %v620
        %v719 = vpack.c.b16 %v623, %v621
        %v720 = vpack.c.b16 %v626, %v624
        %v721 = vpack.c.b16 %v627, %v625
        %v722 = vpack.c.b16 %v630, %v628
        %v723 = vpack.c.b16 %v631, %v629
        %v724 = vpack.c.b16 %v634, %v632
        %v725 = vpack.c.b16 %v635, %v633
        %v726 = vpack.c.b16 %v638, %v636
        %v727 = vpack.c.b16 %v639, %v637
        %v728 = vpack.c.b16 %v642, %v640
        %v729 = vpack.c.b16 %v643, %v641
        %v730 = vpack.c.b16 %v646, %v644
        %v731 = vpack.c.b16 %v647, %v645
        %vm816 = vcmask 261120
        %v818 = vsel %vm816, %v299, 0
        %820 = vmatprep.subr.bf16.mxu0 %v663
        %821 = vmatpush1.bf16.msra.mxu0 %v662
        %822 = vmatprep.subr.bf16.mxu0 %v661
        %823 = vmatpush1.bf16.msra.mxu0 %v660
        %824 = vmatprep.subr.bf16.mxu0 %v659
        %825 = vmatpush1.bf16.msra.mxu0 %v658
        %826 = vmatprep.subr.bf16.mxu0 %v657
        %827 = vmatpush1.bf16.msra.mxu0 %v656
        %828 = vmatprep.subr.bf16.mxu0 %v655
        %829 = vmatpush1.bf16.msra.mxu0 %v654
        %830 = vmatprep.subr.bf16.mxu0 %v653
        %831 = vmatpush1.bf16.msra.mxu0 %v652
        %832 = vmatprep.subr.bf16.mxu0 %v651
        %833 = vmatpush1.bf16.msra.mxu0 %v650
        %834 = vmatprep.subr.bf16.mxu0 %v649
        %835 = vmatpush1.bf16.msra.mxu0 %v648
        %836 = vmatprep.subr.bf16.mxu0 %v679
        %837 = vmatpush2.bf16.msra.mxu0 %v678
        %838 = vmatprep.subr.bf16.mxu0 %v677
        %839 = vmatpush2.bf16.msra.mxu0 %v676
        %840 = vmatprep.subr.bf16.mxu0 %v675
        %841 = vmatpush2.bf16.msra.mxu0 %v674
        %842 = vmatprep.subr.bf16.mxu0 %v673
        %843 = vmatpush2.bf16.msra.mxu0 %v672
        %844 = vmatprep.subr.bf16.mxu0 %v671
        %845 = vmatpush2.bf16.msra.mxu0 %v670
        %846 = vmatprep.subr.bf16.mxu0 %v669
        %847 = vmatpush2.bf16.msra.mxu0 %v668
        %848 = vmatprep.subr.bf16.mxu0 %v667
        %849 = vmatpush2.bf16.msra.mxu0 %v666
        %850 = vmatprep.subr.bf16.mxu0 %v665
        %851 = vmatpush2.bf16.msra.mxu0 %v664
        %852 = vmatprep.mubr.bf16.mxu0 %v295
        %853 = vmatmul.mubr.bf16.gmra.mxu0 %v294
        %v854 = vpop.f32.mrf.mxu0
        %v855 = vadd.f32 %v389, %v854
        %v856 = vpop.f32.mrf.mxu0
        %v857 = vadd.f32 %v393, %v856
        %v858 = vpop.f32.mrf.mxu0
        %v859 = vpop.f32.mrf.mxu0
        %860 = vdwg.mxu0
        %861 = vmatprep.subr.bf16.mxu0 %v695
        %862 = vmatpush1.bf16.msra.mxu0 %v694
        %863 = vmatprep.subr.bf16.mxu0 %v693
        %864 = vmatpush1.bf16.msra.mxu0 %v692
        %865 = vmatprep.subr.bf16.mxu0 %v691
        %866 = vmatpush1.bf16.msra.mxu0 %v690
        %867 = vmatprep.subr.bf16.mxu0 %v689
        %868 = vmatpush1.bf16.msra.mxu0 %v688
        %869 = vmatprep.subr.bf16.mxu0 %v687
        %870 = vmatpush1.bf16.msra.mxu0 %v686
        %871 = vmatprep.subr.bf16.mxu0 %v685
        %872 = vmatpush1.bf16.msra.mxu0 %v684
        %873 = vmatprep.subr.bf16.mxu0 %v683
        %874 = vmatpush1.bf16.msra.mxu0 %v682
        %875 = vmatprep.subr.bf16.mxu0 %v681
        %876 = vmatpush1.bf16.msra.mxu0 %v680
        %877 = vmatprep.subr.bf16.mxu0 %v711
        %878 = vmatpush2.bf16.msra.mxu0 %v710
        %879 = vmatprep.subr.bf16.mxu0 %v709
        %880 = vmatpush2.bf16.msra.mxu0 %v708
        %881 = vmatprep.subr.bf16.mxu0 %v707
        %882 = vmatpush2.bf16.msra.mxu0 %v706
        %883 = vmatprep.subr.bf16.mxu0 %v705
        %884 = vmatpush2.bf16.msra.mxu0 %v704
        %885 = vmatprep.subr.bf16.mxu0 %v703
        %886 = vmatpush2.bf16.msra.mxu0 %v702
        %887 = vmatprep.subr.bf16.mxu0 %v701
        %888 = vmatpush2.bf16.msra.mxu0 %v700
        %889 = vmatprep.subr.bf16.mxu0 %v699
        %890 = vmatpush2.bf16.msra.mxu0 %v698
        %891 = vmatprep.subr.bf16.mxu0 %v697
        %892 = vmatpush2.bf16.msra.mxu0 %v696
        %893 = vmatprep.mubr.bf16.mxu0 %v297
        %894 = vmatmul.mubr.bf16.gmra.mxu0 %v296
        %v895 = vpop.f32.mrf.mxu0
        %v896 = vadd.f32 %v855, %v895
        %v897 = vpop.f32.mrf.mxu0
        %v898 = vadd.f32 %v857, %v897
        %v899 = vpop.f32.mrf.mxu0
        %v900 = vpop.f32.mrf.mxu0
        %901 = vdwg.mxu0
        %902 = vmatprep.subr.bf16.mxu0 %v727
        %903 = vmatpush1.bf16.msra.mxu0 %v726
        %904 = vmatprep.subr.bf16.mxu0 %v725
        %905 = vmatpush1.bf16.msra.mxu0 %v724
        %906 = vmatprep.subr.bf16.mxu0 %v723
        %907 = vmatpush1.bf16.msra.mxu0 %v722
        %908 = vmatprep.subr.bf16.mxu0 %v721
        %909 = vmatpush1.bf16.msra.mxu0 %v720
        %910 = vmatprep.subr.bf16.mxu0 %v719
        %911 = vmatpush1.bf16.msra.mxu0 %v718
        %912 = vmatprep.subr.bf16.mxu0 %v717
        %913 = vmatpush1.bf16.msra.mxu0 %v716
        %914 = vmatprep.subr.bf16.mxu0 %v715
        %915 = vmatpush1.bf16.msra.mxu0 %v714
        %916 = vmatprep.subr.bf16.mxu0 %v713
        %917 = vmatpush1.bf16.msra.mxu0 %v712
        %918 = vmatprep.subr.bf16.mxu0 0
        %919 = vmatpush2.bf16.msra.mxu0 0
        %920 = vmatprep.subr.bf16.mxu0 0
        %921 = vmatpush2.bf16.msra.mxu0 0
        %922 = vmatprep.subr.bf16.mxu0 0
        %923 = vmatpush2.bf16.msra.mxu0 0
        %924 = vmatprep.subr.bf16.mxu0 0
        %925 = vmatpush2.bf16.msra.mxu0 0
        %926 = vmatprep.subr.bf16.mxu0 0
        %927 = vmatpush2.bf16.msra.mxu0 0
        %928 = vmatprep.subr.bf16.mxu0 0
        %929 = vmatpush2.bf16.msra.mxu0 0
        %930 = vmatprep.subr.bf16.mxu0 %v731
        %931 = vmatpush2.bf16.msra.mxu0 %v730
        %932 = vmatprep.subr.bf16.mxu0 %v729
        %933 = vmatpush2.bf16.msra.mxu0 %v728
        %934 = vmatprep.mubr.bf16.mxu0 %v818
        %935 = vmatmul.mubr.bf16.gmra.mxu0 %v298
        %v936 = vpop.f32.mrf.mxu0
        %v937 = vadd.f32 %v896, %v936
        %v938 = vpop.f32.mrf.mxu0
        %v939 = vadd.f32 %v898, %v938
        %v940 = vpop.f32.mrf.mxu0
        %v941 = vpop.f32.mrf.mxu0
        %942 = vdwg.mxu0
        %v943 = vmul.f32 %v937, 0.5
        %v944 = vtanh.pop %v943
        %v945 = vmul.f32 %v944, 0.5
        %v946 = vadd.f32 %v945, 0.5
        %v947 = vtanh.pop %v937
        %v948 = vtanh.pop %v939
        %v949 = vmul.f32 %v939, 0.5
        %v950 = vtanh.pop %v949
        %v951 = vmul.f32 %v950, 0.5
        %v952 = vadd.f32 %v951, 0.5
        %955 = vrot.lane.b32.xlu0 %v947, 48
        %v956 = vpop.permute.xlu0 %955
        %957 = vrot.lane.b32.xlu0 %v948, 48
        %v958 = vpop.permute.xlu0 %957
        %vm959 = vcmask 392192
        %v960 = vsel %vm959, %v956, %v958
        %v962 = vmul.f32 %v946, %v960
        %v963 = vtanh.pop %v962
        %965 = vrot.lane.b32.xlu0 %v963, 32
        %v966 = vpop.permute.xlu0 %965
        %v968 = vmul.f32 %v952, %v966
        %v969 = vpack.c.bf16 %v968, %v968
        %v970 = vld [vmem:[#allocation7] sm:$0xff]
        %v971 = vld [vmem:[#allocation7 + $0xc] sm:$0xff]
        %v972 = vld [vmem:[#allocation7 + $0x18] sm:$0xff]
        %v973 = vld [vmem:[#allocation7 + $0x24] sm:$0xff]
        %v974 = vld [vmem:[#allocation7 + $0x30] sm:$0xff]
        %v975 = vld [vmem:[#allocation7 + $0x3c] sm:$0xff]
        %v976 = vld [vmem:[#allocation7 + $0x48] sm:$0xff]
        %v977 = vld [vmem:[#allocation7 + $0x54] sm:$0xff]
        %v978 = vld [vmem:[#allocation7 + $0x60] sm:$0xff]
        %v979 = vld [vmem:[#allocation7 + $0x6c] sm:$0xff]
        %s980 = scalar_lea.vmem %s4, 1
        %v981 = vld [vmem:[%s980] ss:$8 sm:$0x3]
        %v983 = vlaneseq
        %v984 = vshrl.u32 %v983, 7
        %v985 = vsub.s32 0, %v984
        %v986 = vrot.slane %v981, %v985
        %v987 = vlaneseq
        %v988 = vshrl.u32 %v987, 7
        %v989 = vsub.s32 1, %v988
        %v990 = vrot.slane %v981, %v989
        %994 = vrot.lane.b32.xlu0 %v969, 96
        %v995 = vpop.permute.xlu0 %994
        %v1006 = vunpack.c.l.b16 %v970
        %v1007 = vunpack.c.h.b16 %v970
        %v1008 = vunpack.c.l.b16 %v971
        %v1009 = vunpack.c.h.b16 %v971
        %v1010 = vunpack.c.l.b16 %v972
        %v1011 = vunpack.c.h.b16 %v972
        %v1012 = vunpack.c.l.b16 %v973
        %v1013 = vunpack.c.h.b16 %v973
        %v1014 = vunpack.c.l.b16 %v974
        %v1015 = vunpack.c.h.b16 %v974
        %v1016 = vunpack.c.l.b16 %v975
        %v1017 = vunpack.c.h.b16 %v975
        %v1018 = vunpack.c.l.b16 %v976
        %v1019 = vunpack.c.h.b16 %v976
        %v1020 = vunpack.c.l.b16 %v977
        %v1021 = vunpack.c.h.b16 %v977
        %v1022 = vunpack.c.l.b16 %v978
        %v1023 = vunpack.c.h.b16 %v978
        %v1024 = vunpack.c.l.b16 %v979
        %v1025 = vunpack.c.h.b16 %v979
        %v1026 = vpack.c.b16 %v1008, %v1006
        %v1027 = vpack.c.b16 %v1009, %v1007
        %v1028 = vpack.c.b16 %v1012, %v1010
        %v1029 = vpack.c.b16 %v1013, %v1011
        %v1030 = vpack.c.b16 %v1016, %v1014
        %v1031 = vpack.c.b16 %v1017, %v1015
        %v1032 = vpack.c.b16 %v1020, %v1018
        %v1033 = vpack.c.b16 %v1021, %v1019
        %v1034 = vpack.c.b16 %v1024, %v1022
        %v1035 = vpack.c.b16 %v1025, %v1023
        %vm1046 = vcmask 654336
        %v1048 = vsel %vm1046, %v995, 0
        %1050 = vmatprep.subr.bf16.mxu0 0
        %1051 = vmatpush1.bf16.msra.mxu0 0
        %1052 = vmatprep.subr.bf16.mxu0 0
        %1053 = vmatpush1.bf16.msra.mxu0 0
        %1054 = vmatprep.subr.bf16.mxu0 0
        %1055 = vmatpush1.bf16.msra.mxu0 0
        %1056 = vmatprep.subr.bf16.mxu0 %v1035
        %1057 = vmatpush1.bf16.msra.mxu0 %v1034
        %1058 = vmatprep.subr.bf16.mxu0 %v1033
        %1059 = vmatpush1.bf16.msra.mxu0 %v1032
        %1060 = vmatprep.subr.bf16.mxu0 %v1031
        %1061 = vmatpush1.bf16.msra.mxu0 %v1030
        %1062 = vmatprep.subr.bf16.mxu0 %v1029
        %1063 = vmatpush1.bf16.msra.mxu0 %v1028
        %1064 = vmatprep.subr.bf16.mxu0 %v1027
        %1065 = vmatpush1.bf16.msra.mxu0 %v1026
        %1066 = vmatprep.subr.bf16.mxu0 0
        %1067 = vmatpush2.bf16.msra.mxu0 0
        %1068 = vmatprep.subr.bf16.mxu0 0
        %1069 = vmatpush2.bf16.msra.mxu0 0
        %1070 = vmatprep.subr.bf16.mxu0 0
        %1071 = vmatpush2.bf16.msra.mxu0 0
        %1072 = vmatprep.subr.bf16.mxu0 0
        %1073 = vmatpush2.bf16.msra.mxu0 0
        %1074 = vmatprep.subr.bf16.mxu0 0
        %1075 = vmatpush2.bf16.msra.mxu0 0
        %1076 = vmatprep.subr.bf16.mxu0 0
        %1077 = vmatpush2.bf16.msra.mxu0 0
        %1078 = vmatprep.subr.bf16.mxu0 0
        %1079 = vmatpush2.bf16.msra.mxu0 0
        %1080 = vmatprep.subr.bf16.mxu0 0
        %1081 = vmatpush2.bf16.msra.mxu0 0
        %1082 = vmatprep.mubr.bf16.mxu0 0
        %1083 = vmatmul.mubr.bf16.gmra.mxu0 %v1048
        %v1084 = vpop.f32.mrf.mxu0
        %v1085 = vadd.f32 %v986, %v1084
        %v1086 = vpop.f32.mrf.mxu0
        %v1087 = vadd.f32 %v990, %v1086
        %v1088 = vpop.f32.mrf.mxu0
        %v1089 = vpop.f32.mrf.mxu0
        %1090 = vdwg.mxu0
        %v1091 = vmul.f32 %v1085, 0.5
        %v1092 = vtanh.pop %v1091
        %v1093 = vmul.f32 %v1092, 0.5
        %v1094 = vadd.f32 %v1093, 0.5
        %v1095 = vtanh.pop %v1085
        %v1096 = vtanh.pop %v1087
        %v1097 = vmul.f32 %v1087, 0.5
        %v1098 = vtanh.pop %v1097
        %v1099 = vmul.f32 %v1098, 0.5
        %v1100 = vadd.f32 %v1099, 0.5
        %1103 = vrot.lane.b32.xlu0 %v1095, 48
        %v1104 = vpop.permute.xlu0 %1103
        %1105 = vrot.lane.b32.xlu0 %v1096, 48
        %v1106 = vpop.permute.xlu0 %1105
        %v1107 = vsel %vm959, %v1104, %v1106
        %v1109 = vmul.f32 %v1094, %v1107
        %v1110 = vtanh.pop %v1109
        %1112 = vrot.lane.b32.xlu0 %v1110, 32
        %v1113 = vpop.permute.xlu0 %1112
        %v1115 = vmul.f32 %v1100, %v1113
        %v1116 = vpack.c.bf16 %v1115, %v1115
        %v1117 = vld [vmem:[#allocation7 + $0x8] sm:$0xf]
        %v1118 = vld [vmem:[#allocation7 + $0x14] sm:$0xf]
        %v1119 = vld [vmem:[#allocation7 + $0x20] sm:$0xf]
        %v1120 = vld [vmem:[#allocation7 + $0x2c] sm:$0xf]
        %v1121 = vld [vmem:[#allocation7 + $0x38] sm:$0xf]
        %v1122 = vld [vmem:[#allocation7 + $0x44] sm:$0xf]
        %v1123 = vld [vmem:[#allocation7 + $0x50] sm:$0xf]
        %v1124 = vld [vmem:[#allocation7 + $0x5c] sm:$0xf]
        %v1125 = vld [vmem:[#allocation7 + $0x68] sm:$0xf]
        %v1126 = vld [vmem:[#allocation7 + $0x74] sm:$0xf]
        %v1127 = vld [vmem:[%s4 + $0x2] ss:$0 sm:$0xff]
        %1129 = vrot.lane.b32.xlu0 %v1116, 96
        %v1130 = vpop.permute.xlu0 %1129
        %v1141 = vunpack.c.l.b16 %v1117
        %v1142 = vunpack.c.l.b16 %v1118
        %v1143 = vunpack.c.l.b16 %v1119
        %v1144 = vunpack.c.l.b16 %v1120
        %v1145 = vunpack.c.l.b16 %v1121
        %v1146 = vunpack.c.l.b16 %v1122
        %v1147 = vunpack.c.l.b16 %v1123
        %v1148 = vunpack.c.l.b16 %v1124
        %v1149 = vunpack.c.l.b16 %v1125
        %v1150 = vunpack.c.l.b16 %v1126
        %v1151 = vpack.c.b16 %v1142, %v1141
        %v1152 = vpack.c.b16 %v1144, %v1143
        %v1153 = vpack.c.b16 %v1146, %v1145
        %v1154 = vpack.c.b16 %v1148, %v1147
        %v1155 = vpack.c.b16 %v1150, %v1149
        %v1162 = vsel %vm1046, %v1130, 0
        %1164 = vmatprep.subr.bf16.mxu0 0
        %1165 = vmatpush1.bf16.msra.mxu0 0
        %1166 = vmatprep.subr.bf16.mxu0 0
        %1167 = vmatpush1.bf16.msra.mxu0 0
        %1168 = vmatprep.subr.bf16.mxu0 0
        %1169 = vmatpush1.bf16.msra.mxu0 0
        %1170 = vmatprep.subr.bf16.mxu0 0
        %1171 = vmatpush1.bf16.msra.mxu0 %v1155
        %1172 = vmatprep.subr.bf16.mxu0 0
        %1173 = vmatpush1.bf16.msra.mxu0 %v1154
        %1174 = vmatprep.subr.bf16.mxu0 0
        %1175 = vmatpush1.bf16.msra.mxu0 %v1153
        %1176 = vmatprep.subr.bf16.mxu0 0
        %1177 = vmatpush1.bf16.msra.mxu0 %v1152
        %1178 = vmatprep.subr.bf16.mxu0 0
        %1179 = vmatpush1.bf16.msra.mxu0 %v1151
        %1180 = vmatprep.subr.bf16.mxu0 0
        %1181 = vmatpush2.bf16.msra.mxu0 0
        %1182 = vmatprep.subr.bf16.mxu0 0
        %1183 = vmatpush2.bf16.msra.mxu0 0
        %1184 = vmatprep.subr.bf16.mxu0 0
        %1185 = vmatpush2.bf16.msra.mxu0 0
        %1186 = vmatprep.subr.bf16.mxu0 0
        %1187 = vmatpush2.bf16.msra.mxu0 0
        %1188 = vmatprep.subr.bf16.mxu0 0
        %1189 = vmatpush2.bf16.msra.mxu0 0
        %1190 = vmatprep.subr.bf16.mxu0 0
        %1191 = vmatpush2.bf16.msra.mxu0 0
        %1192 = vmatprep.subr.bf16.mxu0 0
        %1193 = vmatpush2.bf16.msra.mxu0 0
        %1194 = vmatprep.subr.bf16.mxu0 0
        %1195 = vmatpush2.bf16.msra.mxu0 0
        %1196 = vmatprep.mubr.bf16.mxu0 0
        %1197 = vmatmul.mubr.bf16.gmra.mxu0 %v1162
        %v1198 = vpop.f32.mrf.mxu0
        %v1199 = vadd.f32 %v1127, %v1198
        %v1200 = vpop.f32.mrf.mxu0
        %v1201 = vpop.f32.mrf.mxu0
        %v1202 = vpop.f32.mrf.mxu0
        %1203 = vdwg.mxu0
        %v1204 = vlaneseq
        %v1205 = vand.u32 %v1204, 127
        %vm1206 = vcmp.lt.s32.totalorder %v1205, 20
        %v1207 = vsel %vm1206, %v1199, -inf
        %1208 = vmax.xlane.f32.xlu0 %v1207
        %v1209 = vpop.xlane.xlu0 %1208
        %v1210 = vsub.f32 %v1199, %v1209
        %v1211 = vmul.f32 %v1210, 1.442695
        %v1212 = vpow.pop %v1211
        %v1213 = vsel %vm1206, %v1212, 0.0
        %1214 = vadd.xlane.f32.xlu0 %v1213
        %v1215 = vpop.xlane.xlu0 %1214
        %v1216 = vlog2.pop %v1215
        %v1217 = vmul.f32 %v1216, 0.6931472
        %v1218 = vsub.f32 %v1210, %v1217
        %v1219 = vrcp.pop %v1215
        %v1220 = vmul.f32 %v1213, %v1219
        %vm1221 = vcmp.eq.s32.totalorder %v1205, 20
        %v1222 = vld [vmem:[%s286] sm:$0xff]
        %vm1223 = vcmp.eq.s32.totalorder %v1205, 21
        %v1224 = vsel %vm1223, 1.0, 0.0
        %1226 = vset.pattern.permute.xlu0 0
        %1227 = vperm.xlu0 %1226, %v1222
        %v1228 = vpop.permute.xlu0 %1227
        %v1230 = vsel %vm1221, %v1228, %v1224
        %v1231 = vadd.f32 %v1220, %v1230
        %v1232 = vld [vmem:[%s4 + $0x3] ss:$0 sm:$0xff]
        %v1233 = vmul.f32 %v1231, %v1232
        %1234 = vadd.xlane.f32.xlu0 %v1233
        %v1235 = vpop.xlane.xlu0 %1234
        %v1236 = vsel %vm1221, %v1235, 0.0
        %v1237 = vsel %vm1206, %v1218, %v1236
        %1238 = vst [vmem:[%s282] sm:$0xff] %v1237
        %s1239 = sand.u32 %s146, 1
        %s1240 = scalar_lea.sflag [#allocation4], %s1239
        %s1241 = sand.u32 %s146, 1
        %s1242 = smul.addr %s1241, 8
        %s1243 = scalar_lea.vmem [#allocation8], %s1242
        // Predicated region
        $region53: #{tpu_custom_call.1} parent=39 // pred_check
          %p1244 = pneg %p156
        $region54: #{tpu_custom_call.1} parent=39 // pred_check_branch
          %1246 = sbr.rel (%p1244) target = $region56
        $region55: #{tpu_custom_call.1} parent=39 // pred_region
          %s1248 = ssub.s32 128, 128
          %1249 = vsyncadd %s1240, %s1248
          %s1250 = smul.addr %s23, 128
          %s1251 = scalar_lea.hbm %s5, %s1250
          %s1253 = sshll.u32 %s1243, 4
          %s1254 = int_to_ptr.vmem [resolvable:$true] %s1253
          %1256 = dma.vmem_to_hbm [thread:$0]  %s1254, 128, %s1251, %s1240
        $region56: #{tpu_custom_call.1} parent=39 // pred_fallthru
          _
      $region40: #{tpu_custom_call.1} parent=5 // pred_fallthru
        _
      %p1257 = scmp.le.s32.totalorder 2, %s18
      // Predicated region
      $region57: #{tpu_custom_call.1} parent=5 // pred_check
        %p1258 = pneg %p1257
      $region58: #{tpu_custom_call.1} parent=5 // pred_check_branch
        %1260 = sbr.rel (%p1258) target = $region60
      $region59: #{tpu_custom_call.1} parent=5 // pred_region
        %s1261 = ssub.s32 %s18, 2
        // Predicated region
        $region61: #{tpu_custom_call.1} parent=59 // pred_check
          %p1262 = pneg %p162
        $region62: #{tpu_custom_call.1} parent=59 // pred_check_branch
          %1264 = sbr.rel (%p1262) target = $region64
        $region63: #{tpu_custom_call.1} parent=59 // pred_region
          %s1265 = sand.u32 %s147, 1
          %s1266 = scalar_lea.sflag [#allocation4], %s1265
          %s1267 = sand.u32 %s147, 1
          %s1268 = smul.addr %s1267, 8
          %s1269 = scalar_lea.vmem [#allocation8], %s1268
          %1270 = dma.done %s1266, 128
        $region64: #{tpu_custom_call.1} parent=59 // pred_fallthru
          _
      $region60: #{tpu_custom_call.1} parent=5 // pred_fallthru
        _
    $region6: #{tpu_custom_call.1} parent=1 // loop_footer
      %s22 = sadd.s32 1, %s18
    $region7: #{tpu_custom_call.1} parent=1 // loop_footer_branch
      %17 = sbr.rel target = $region3
    $region8: #{tpu_custom_call.1} parent=1 // loop_exit
      _
    %1271 = vsyncpa [#allocation3], 1
    %s1272 = scalar_lea.sflag [#allocation3], 1
    %1273 = vsyncpa %s1272, 1
    %1274 = vsyncpa [#allocation6], 1
    %1275 = vsyncpa [#allocation4], 1
    %s1276 = scalar_lea.sflag [#allocation4], 1
    %1277 = vsyncpa %s1276, 1

</llo_original>
